<compile_context>
chip_gen: v6e
topology: v6e:2x2x1
jax: 0.10.0
libtpu: 0.0.40
codegen_flags: <defaults>
</compile_context>

<pallas_src>
import jax
import jax.numpy as jnp
from jax.experimental import pallas as pl
from jax.experimental.pallas import tpu as pltpu


def chomp1d_kernel(x_ref, o_ref):
    # x_ref: [tr, in_w]   o_ref: [tr, L_out]   (in_w == L_out or in_w == L)
    # Static slice of the leading lanes; single load + single store.
    o_ref[...] = x_ref[:, : o_ref.shape[1]]


def reference_forward(x, chomp_size):
    """Plain-JAX reference with identical semantics (PyTorch x[:, :, :-chomp])."""
    return x[:, :, : x.shape[-1] - chomp_size]


def chomp1d_forward(x, chomp_size, *, target_block_bytes=4 << 20,
                    force_kernel=False):
    """x: [B, C, L]  ->  x[:, :, :L - chomp_size] (contiguous)."""
    B, C, L = x.shape
    # PyTorch's x[:, :, :-0] would be empty; we forbid chomp_size == 0 and
    # require at least one surviving time step.
    assert 0 < chomp_size < L, "chomp_size must be in (0, L)"
    L_out = L - chomp_size
    R = B * C
    itemsize = jnp.dtype(x.dtype).itemsize
    total_bytes = R * L * itemsize

    # --- dispatch: a standalone copy kernel is a loss for tiny inputs or
    # narrow (masked-store) outputs; let XLA fuse the slice instead. ---------
    if not force_kernel and (total_bytes < (256 << 10) or L_out < 128):
        return x[:, :, :L_out]

    x2 = x.reshape(R, L)

    # Chomp in the input BlockSpec when the truncated width is lane-aligned,
    # so the chomped tail is never DMA'd from HBM.
    chomp_in_spec = (L_out % 128 == 0)
    in_w = L_out if chomp_in_spec else L

    # Sublane pack for the row dim (8 f32 / 16 bf16 / 32 int8).
    pack = max(8, 32 // itemsize)

    # Byte-budgeted row tile (input block dominates the footprint).
    tr = (target_block_bytes // (in_w * itemsize)) // pack * pack
    tr = max(pack, int(tr))
    if tr >= R:
        tr = R  # single full-extent block: always legal, grid collapses to 1
    grid = (pl.cdiv(R, tr),)

    # Double-buffered VMEM footprint (in + out blocks); keep headroom under
    # the smallest scoped budget (v7x: 64 MiB physical, 32 MiB scoped).
    block_bytes = 2 * (tr * in_w + tr * L_out) * itemsize
    vmem_limit = int(min(max(block_bytes + (4 << 20), 16 << 20), 48 << 20))

    out = pl.pallas_call(
        chomp1d_kernel,
        out_shape=jax.ShapeDtypeStruct((R, L_out), x.dtype),
        grid=grid,
        in_specs=[pl.BlockSpec((tr, in_w), lambda i: (i, 0))],
        out_specs=pl.BlockSpec((tr, L_out), lambda i: (i, 0)),
        compiler_params=pltpu.CompilerParams(
            dimension_semantics=("parallel",),
            vmem_limit_bytes=vmem_limit),
        cost_estimate=pl.CostEstimate(
            flops=0, transcendentals=0,
            bytes_accessed=(R * in_w + R * L_out) * itemsize),
    )(x2)

    return out.reshape(B, C, L_out)


if __name__ == "__main__":
    root = jax.random.PRNGKey(0)
    k0, k1, k2 = jax.random.split(root, 3)

    # 1) Spec-sized tiny input (B=2, C=4, L=16): dispatches to the fused XLA
    #    slice (kernelizing a 512 B copy is pure launch overhead).
    B, C, L, chomp = 2, 4, 16, 4
    x_small = jax.random.normal(k0, (B, C, L), jnp.float32)
    out_small = jax.block_until_ready(chomp1d_forward(x_small, chomp))
    assert out_small.shape == (B, C, L - chomp), out_small.shape
    assert jnp.array_equal(out_small, reference_forward(x_small, chomp))

    # 2) Pallas kernel path, lane-dense output (L_out = 256 is a multiple of
    #    128 -> chomp folded into the input BlockSpec; tail never read).
    B, C, L, chomp = 2, 4, 384, 128
    x_dense = jax.random.normal(k1, (B, C, L), jnp.float32)
    out_dense = jax.block_until_ready(
        chomp1d_forward(x_dense, chomp, force_kernel=True))
    assert out_dense.shape == (B, C, L - chomp), out_dense.shape
    assert jnp.array_equal(out_dense, reference_forward(x_dense, chomp))

    # 3) Pallas kernel path, L_out not a multiple of 128 (full-width read,
    #    slice in the body; output block equals the full output width).
    B, C, L, chomp = 2, 4, 200, 8
    x_odd = jax.random.normal(k2, (B, C, L), jnp.float32)
    out_odd = jax.block_until_ready(
        chomp1d_forward(x_odd, chomp, force_kernel=True))
    assert out_odd.shape == (B, C, L - chomp), out_odd.shape
    assert jnp.array_equal(out_odd, reference_forward(x_odd, chomp))

    print("KERNEL_OK")
</pallas_src>

<mosaic_0001>
module attributes {stable_mosaic.version = 11 : i64} {
  func.func @chomp1d_kernel(%arg0: i32, %arg1: memref<8x256xf32, #tpu.memory_space<vmem>>, %arg2: memref<8x256xf32, #tpu.memory_space<vmem>>) attributes {dimension_semantics = [#tpu.dimension_semantics<parallel>], iteration_bounds = array<i64: 1>, scalar_prefetch = 0 : i64, scratch_operands = 0 : i64, tpu.core_type = #tpu.core_type<tc>, window_params = [{transform_indices = @transform_0, window_bounds = array<i64: 8, 256>}, {transform_indices = @transform_1, window_bounds = array<i64: 8, 256>}]} {
    %c0 = arith.constant 0 : index
    %c0_0 = arith.constant 0 : index
    %0 = vector.load %arg1[%c0, %c0_0] : memref<8x256xf32, #tpu.memory_space<vmem>>, vector<8x256xf32>
    %c0_1 = arith.constant 0 : index
    %c0_2 = arith.constant 0 : index
    %1 = vector.load %arg2[%c0_1, %c0_2] : memref<8x256xf32, #tpu.memory_space<vmem>>, vector<8x256xf32>
    tpu.vector_store %arg2[%c0_1, %c0_2], %0 {strides = array<i32>} : memref<8x256xf32, #tpu.memory_space<vmem>>, vector<8x256xf32>,
    return
  }
  func.func @transform_0(%arg0: i32) -> (i32, i32) {
    %c0_i32 = arith.constant 0 : i32
    %c0_i32_0 = arith.constant 0 : i32
    return %arg0, %c0_i32 : i32, i32
  }
  func.func @transform_1(%arg0: i32) -> (i32, i32) {
    %c0_i32 = arith.constant 0 : i32
    %c0_i32_0 = arith.constant 0 : i32
    return %arg0, %c0_i32 : i32, i32
  }
}

</mosaic_0001>

<llo_original>
// kernel: tpu_custom_call.1
$region0: #{tpu_custom_call.1}
  #allocation0 [shape = 'u32[]', space=smem, size = 0x4, offset = 0x4, fixed_abs, tag = 'smem constant byte address 0x4 - core index']
  #allocation1 [shape = 'u32[144,128]{1,0:T(1,128)}', space=vmem, size = 0x12000, scoped, tag = 'internal scratch']
  %s0 = inlined_call_operand.hbm [shape: f32[8,384], index: 0, kind: input, shape index: {}]
  %s1 = inlined_call_operand.hbm [shape: f32[8,256], index: 1, kind: output, shape index: {}]
  %s2 = sld [smem:[#allocation0]]
  $region18: #{tpu_custom_call.1} parent=0
    _
  %s4 = ssub.s32 1, %s2
  %s5 = scalar_select 0, %s4, %s2
  $region1: #{tpu_custom_call.1} parent=0
    #allocation2 [shape = 'u8[8192]{0}', space=vmem, size = 0x2000, scoped, tag = 'input window, operand 0, single buffered']
    #allocation3 [shape = 's32[1]{0}', space=sflag, size = 0x4, scoped, tag = 'scoped memory for tpu_custom_call.1']
    #allocation4 [shape = 's32[1]{0}', space=sflag, size = 0x4, scoped, tag = 'scoped memory for tpu_custom_call.1']
    #allocation5 [shape = 'u8[8192]{0}', space=vmem, size = 0x2000, scoped, tag = 'output window, operand 0, single buffered']
    %6 = vsyncpa [#allocation3], 0
    %7 = vsyncpa [#allocation4], 0
    // Predicated region
    $region2: #{tpu_custom_call.1} parent=1 // pred_check
      _
    $region3: #{tpu_custom_call.1} parent=1 // pred_check_branch
      %9 = sbr.rel (0) target = $region5
    $region4: #{tpu_custom_call.1} parent=1 // pred_region
      %s11 = ssub.s32 256, 256
      %12 = vsyncadd [#allocation3], %s11
      %s14 = sshll.u32 [#allocation2], 4
      %s15 = int_to_ptr.vmem [resolvable:$true] %s14
      %17 = dma.hbm_to_vmem [thread:$0]  %s0, 256, %s15, [#allocation3]
    $region5: #{tpu_custom_call.1} parent=1 // pred_fallthru
      _
    // Predicated region
    $region6: #{tpu_custom_call.1} parent=1 // pred_check
      _
    $region7: #{tpu_custom_call.1} parent=1 // pred_check_branch
      %19 = sbr.rel (0) target = $region9
    $region8: #{tpu_custom_call.1} parent=1 // pred_region
      %20 = dma.done [#allocation3], 256
    $region9: #{tpu_custom_call.1} parent=1 // pred_fallthru
      _
    %v21 = vld [vmem:[#allocation2] sm:$0xff]
    %v22 = vld [vmem:[#allocation2 + $0x8] sm:$0xff]
    %23 = vst [vmem:[#allocation5] sm:$0xff] %v21
    %24 = vst [vmem:[#allocation5 + $0x8] sm:$0xff] %v22
    // Predicated region
    $region10: #{tpu_custom_call.1} parent=1 // pred_check
      _
    $region11: #{tpu_custom_call.1} parent=1 // pred_check_branch
      %26 = sbr.rel (0) target = $region13
    $region12: #{tpu_custom_call.1} parent=1 // pred_region
      %s28 = ssub.s32 256, 256
      %29 = vsyncadd [#allocation4], %s28
      %s31 = sshll.u32 [#allocation5], 4
      %s32 = int_to_ptr.vmem [resolvable:$true] %s31
      %34 = dma.vmem_to_hbm [thread:$0]  %s32, 256, %s1, [#allocation4]
    $region13: #{tpu_custom_call.1} parent=1 // pred_fallthru
      _
    // Predicated region
    $region14: #{tpu_custom_call.1} parent=1 // pred_check
      _
    $region15: #{tpu_custom_call.1} parent=1 // pred_check_branch
      %36 = sbr.rel (0) target = $region17
    $region16: #{tpu_custom_call.1} parent=1 // pred_region
      %37 = dma.done [#allocation4], 256
    $region17: #{tpu_custom_call.1} parent=1 // pred_fallthru
      _
    %38 = vsyncpa [#allocation3], 1
    %39 = vsyncpa [#allocation4], 1

</llo_original>
